<compile_context>
chip_gen: v6e
topology: v6e:2x2x1
jax: 0.10.0
libtpu: 0.0.40
codegen_flags: <defaults>
</compile_context>

<pallas_src>
import functools

import jax
import jax.numpy as jnp
from jax import lax
from jax.experimental import pallas as pl
from jax.experimental.pallas import tpu as pltpu

_VMEM_BUDGET_BYTES = 24 * 1024 * 1024   # pipeline buffers + live temporaries
_VMEM_LIMIT_BYTES = 40 * 1024 * 1024    # < 64 MiB physical on v7x, ample on v5e/v6e
_MAX_TILE_ROWS = 2048


def _choose_tile_rows(B, F, itemsize, max_rows):
    if max_rows is None:
        # 2 input streams x 2 pipeline buffers, full (2F) width, input dtype.
        pipeline_per_row = 2 * 2 * (2 * F) * itemsize
        # ~peak live half-width f32 intermediates inside the kernel body.
        temps_per_row = 16 * F * 4
        tb = _VMEM_BUDGET_BYTES // max(pipeline_per_row + temps_per_row, 1)
        tb = max(8, min(_MAX_TILE_ROWS, (tb // 8) * 8))
    else:
        tb = max(1, int(max_rows))
    if B <= tb:
        return B                              # single tile: block == full batch
    return max(8, (tb // 8) * 8)              # keep sublane dim a multiple of 8


def _gamma_loss_kernel(g_ref, t_ref, out_ref, *scratch, delta, B, F,
                       tiles_per_split, tile_rows, aligned, compute_smooth,
                       need_row_mask, vec_acc):
    c = pl.program_id(0)          # core/split index ("parallel")
    i = pl.program_id(1)          # batch-tile index within split ("arbitrary")
    last_i = pl.num_programs(1) - 1

    if vec_acc:
        if compute_smooth:
            acc_h, acc_s = scratch
        else:
            (acc_h,) = scratch
            acc_s = None
        acc_sc = None
    else:
        (acc_sc,) = scratch
        acc_h = acc_s = None

    @pl.when(i == 0)
    def _init():
        if vec_acc:
            acc_h[...] = jnp.zeros_like(acc_h)
            if compute_smooth:
                acc_s[...] = jnp.zeros_like(acc_s)
        else:
            acc_sc[0] = jnp.float32(0.0)
            acc_sc[1] = jnp.float32(0.0)

    # One contiguous full-width load per operand; upcast to f32 in-kernel so
    # bf16/f16 inputs stay narrow over HBM.
    g = g_ref[...].astype(jnp.float32)
    t = t_ref[...].astype(jnp.float32)
    # When F % 128 == 0 these slices are on vreg (lane) boundaries -> free.
    g_mag, g_ph = g[:, :F], g[:, F:]
    t_mag, t_ph = t[:, :F], t[:, F:]

    if need_row_mask:
        tile_idx = c * tiles_per_split + i            # UNclamped logical tile
        rows = tile_idx * tile_rows + lax.broadcasted_iota(
            jnp.int32, (tile_rows, F), 0)
        row_mask = rows < B
    else:
        row_mask = None

    # ---- Huber term on complex re/im parts ----
    gx = g_mag * jnp.cos(g_ph)
    gy = g_mag * jnp.sin(g_ph)
    tx = t_mag * jnp.cos(t_ph)
    ty = t_mag * jnp.sin(t_ph)
    dx = gx - tx
    dy = gy - ty
    diff = jnp.abs(dx) + jnp.abs(dy)
    huber = jnp.where(diff < delta,
                      0.5 * (dx * dx + dy * dy),
                      delta * (diff - 0.5 * delta))
    if row_mask is not None:
        huber = jnp.where(row_mask, huber, 0.0)

    if vec_acc:
        # Sublane-group reduce (pure VPU adds) into a vreg-shaped accumulator;
        # the scalar reduce is deferred to the finalize step.
        acc_h[...] += huber.reshape(tile_rows // 8, 8, F).sum(axis=0)
    else:
        acc_sc[0] += jnp.sum(huber)

    # ---- magnitude smoothness term ----
    if compute_smooth:
        if aligned:
            # XLU rolls (otherwise-idle slot) + lane mask instead of three
            # overlapping lane-offset slices.
            m1 = pltpu.roll(g_mag, F - 1, 1)   # m1[:, j] = g_mag[:, j+1 (mod F)]
            m2 = pltpu.roll(g_mag, F - 2, 1)   # m2[:, j] = g_mag[:, j+2 (mod F)]
            second = jnp.abs(m2 - 2.0 * m1 + g_mag)
            cols = lax.broadcasted_iota(jnp.int32, second.shape, 1)
            mask = cols < (F - 2)
            if row_mask is not None:
                mask = jnp.logical_and(mask, row_mask)
            second = jnp.where(mask, second, 0.0)
        else:
            second = jnp.abs(
                g_mag[:, 2:] - 2.0 * g_mag[:, 1:-1] + g_mag[:, :-2])
            if row_mask is not None:
                second = jnp.where(row_mask[:, : F - 2], second, 0.0)
        if vec_acc:
            acc_s[...] += second.reshape(
                tile_rows // 8, 8, second.shape[1]).sum(axis=0)
        else:
            acc_sc[1] += jnp.sum(second)

    @pl.when(i == last_i)
    def _finalize():
        if vec_acc:
            out_ref[0, 0] = jnp.sum(acc_h[...])
            if compute_smooth:
                out_ref[0, 1] = jnp.sum(acc_s[...])
            else:
                out_ref[0, 1] = jnp.float32(0.0)
        else:
            out_ref[0, 0] = acc_sc[0]
            out_ref[0, 1] = acc_sc[1]


def gamma_loss(gamma, target, *, delta=1.0, smoothness_weight=0.0,
               max_rows_per_tile=None, num_core_splits=None):
    """Pallas TPU implementation of AntennaDesign gamma_loss.forward.

    gamma, target: (B, 2F) float arrays (f32/bf16/...); columns [0:F) are
    magnitude, [F:2F) are phase. Returns a scalar float32 loss.
    """
    assert gamma.shape == target.shape and gamma.ndim == 2
    B, twoF = gamma.shape
    assert twoF % 2 == 0
    F = twoF // 2

    itemsize = jnp.dtype(gamma.dtype).itemsize
    TB = _choose_tile_rows(B, F, itemsize, max_rows_per_tile)
    num_tiles = pl.cdiv(B, TB)

    if num_core_splits is None:
        # Leading "parallel" axis -> batch split across the 2 TensorCores on
        # v7x. Only auto-enabled when it costs (almost) nothing on single-core
        # chips: an odd tile count adds one fully-masked dummy tile, so require
        # an even tile count or enough tiles that the waste is small.
        num_splits = 2 if (num_tiles >= 2 and
                           (num_tiles % 2 == 0 or num_tiles >= 9)) else 1
    else:
        num_splits = min(max(1, int(num_core_splits)), num_tiles)
    tps = pl.cdiv(num_tiles, num_splits)          # tiles per split

    aligned = (F % 128 == 0)                      # lane-aligned mag/phase slices
    # NOTE: if smoothness_weight != 0 and F <= 2 the reference takes the mean
    # of an empty tensor (NaN); we drop the term instead on degenerate shapes.
    compute_smooth = (float(smoothness_weight) != 0.0) and (F > 2)
    vec_acc = (TB % 8 == 0)
    padded_rows = num_splits * tps * TB
    need_row_mask = padded_rows > B

    kernel = functools.partial(
        _gamma_loss_kernel,
        delta=float(delta), B=B, F=F,
        tiles_per_split=tps, tile_rows=TB,
        aligned=aligned, compute_smooth=compute_smooth,
        need_row_mask=need_row_mask, vec_acc=vec_acc,
    )

    if num_splits * tps == num_tiles:
        def in_map(c, i):
            return (c * tps + i, 0)
    else:
        last_tile = num_tiles - 1

        def in_map(c, i):
            # Clamp so a possible dummy tile of an uneven split re-reads the
            # last real tile in-bounds; its rows are zeroed by the row mask.
            return (jnp.minimum(c * tps + i, last_tile), 0)

    in_specs = [
        pl.BlockSpec((TB, twoF), in_map),   # gamma: one contiguous DMA stream
        pl.BlockSpec((TB, twoF), in_map),   # target: one contiguous DMA stream
    ]

    if vec_acc:
        scratch_shapes = [pltpu.VMEM((8, F), jnp.float32)]
        if compute_smooth:
            s_cols = F if aligned else (F - 2)
            scratch_shapes.append(pltpu.VMEM((8, s_cols), jnp.float32))
    else:
        scratch_shapes = [pltpu.SMEM((2,), jnp.float32)]

    cost = pl.CostEstimate(
        flops=22 * B * F,
        transcendentals=4 * B * F,
        bytes_accessed=2 * B * twoF * itemsize + 8 * num_splits,
    )

    partials = pl.pallas_call(
        kernel,
        grid=(num_splits, tps),
        out_shape=jax.ShapeDtypeStruct((num_splits, 2), jnp.float32),
        in_specs=in_specs,
        out_specs=pl.BlockSpec((1, 2), lambda c, i: (c, 0),
                               memory_space=pltpu.SMEM),
        scratch_shapes=scratch_shapes,
        compiler_params=pltpu.CompilerParams(
            dimension_semantics=("parallel", "arbitrary"),
            vmem_limit_bytes=_VMEM_LIMIT_BYTES,
        ),
        cost_estimate=cost,
    )(gamma, target)

    # Combine per-core raw partial sums and normalize in the wrapper.
    loss = jnp.sum(partials[:, 0]) / jnp.float32(B * F)
    if compute_smooth:
        loss = loss + jnp.float32(smoothness_weight) * (
            jnp.sum(partials[:, 1]) / jnp.float32(B * (F - 2)))
    return loss


def _gamma_loss_ref(gamma, target, *, delta=1.0, smoothness_weight=0.0):
    # pure-JAX reference mirroring the PyTorch module, for correctness checking
    half = gamma.shape[1] // 2
    g_mag, g_ph = gamma[:, :half], gamma[:, half:]
    t_mag, t_ph = target[:, :half], target[:, half:]
    gx, gy = g_mag * jnp.cos(g_ph), g_mag * jnp.sin(g_ph)
    tx, ty = t_mag * jnp.cos(t_ph), t_mag * jnp.sin(t_ph)
    diff = jnp.abs(gx - tx) + jnp.abs(gy - ty)
    loss = jnp.where(
        diff < delta,
        0.5 * (jnp.square(gx - tx) + jnp.square(gy - ty)),
        delta * (diff - 0.5 * delta),
    ).mean()
    second_order = jnp.abs(g_mag[:, 2:] - 2.0 * g_mag[:, 1:-1] + g_mag[:, :-2])
    return loss + smoothness_weight * second_order.mean()


if __name__ == "__main__":
    key = jax.random.PRNGKey(0)
    delta, w = 1.0, 0.1

    # Case 1: aligned F -> roll-based smoothness, single tile, vreg accumulator.
    k1, k2 = jax.random.split(key)
    B, F = 8, 128
    g = jax.random.normal(k1, (B, 2 * F), dtype=jnp.float32)
    t = jax.random.normal(k2, (B, 2 * F), dtype=jnp.float32)
    out = jax.block_until_ready(
        gamma_loss(g, t, delta=delta, smoothness_weight=w))
    ref = _gamma_loss_ref(g, t, delta=delta, smoothness_weight=w)
    assert jnp.allclose(out, ref, rtol=1e-5, atol=1e-5), (out, ref)

    # Case 2: batch tiling with a ragged last tile (row masking), single split.
    k3, k4 = jax.random.split(k1)
    B2 = 20
    g2 = jax.random.normal(k3, (B2, 2 * F), dtype=jnp.float32)
    t2 = jax.random.normal(k4, (B2, 2 * F), dtype=jnp.float32)
    out2 = jax.block_until_ready(
        gamma_loss(g2, t2, delta=delta, smoothness_weight=w,
                   max_rows_per_tile=8))
    ref2 = _gamma_loss_ref(g2, t2, delta=delta, smoothness_weight=w)
    assert jnp.allclose(out2, ref2, rtol=1e-5, atol=1e-5), (out2, ref2)

    # Case 3: F not a multiple of 128 -> unaligned fallback path.
    k5, k6 = jax.random.split(k3)
    F3 = 64
    g3 = jax.random.normal(k5, (B, 2 * F3), dtype=jnp.float32)
    t3 = jax.random.normal(k6, (B, 2 * F3), dtype=jnp.float32)
    out3 = jax.block_until_ready(
        gamma_loss(g3, t3, delta=delta, smoothness_weight=w))
    ref3 = _gamma_loss_ref(g3, t3, delta=delta, smoothness_weight=w)
    assert jnp.allclose(out3, ref3, rtol=1e-5, atol=1e-5), (out3, ref3)

    # Case 4: bf16 inputs stay bf16 over HBM; upcast happens inside the kernel.
    k7, k8 = jax.random.split(k5)
    B4 = 16
    g4 = jax.random.normal(k7, (B4, 2 * F), dtype=jnp.float32).astype(jnp.bfloat16)
    t4 = jax.random.normal(k8, (B4, 2 * F), dtype=jnp.float32).astype(jnp.bfloat16)
    out4 = jax.block_until_ready(
        gamma_loss(g4, t4, delta=delta, smoothness_weight=w))
    ref4 = _gamma_loss_ref(g4.astype(jnp.float32), t4.astype(jnp.float32),
                           delta=delta, smoothness_weight=w)
    assert jnp.allclose(out4, ref4, rtol=1e-5, atol=1e-5), (out4, ref4)

    # Case 5: even tile count -> automatic 2-way (megacore-style) split.
    k9, k10 = jax.random.split(k7)
    B5 = 32
    g5 = jax.random.normal(k9, (B5, 2 * F), dtype=jnp.float32)
    t5 = jax.random.normal(k10, (B5, 2 * F), dtype=jnp.float32)
    out5 = jax.block_until_ready(
        gamma_loss(g5, t5, delta=delta, smoothness_weight=w,
                   max_rows_per_tile=8))
    ref5 = _gamma_loss_ref(g5, t5, delta=delta, smoothness_weight=w)
    assert jnp.allclose(out5, ref5, rtol=1e-5, atol=1e-5), (out5, ref5)

    # Case 6: forced 2-way split with odd tile count + ragged last tile
    # (exercises the clamped dummy-tile path).
    out6 = jax.block_until_ready(
        gamma_loss(g2, t2, delta=delta, smoothness_weight=w,
                   max_rows_per_tile=8, num_core_splits=2))
    assert jnp.allclose(out6, ref2, rtol=1e-5, atol=1e-5), (out6, ref2)

    # Case 7: tiny batch (< 8 rows) -> scalar SMEM accumulator fallback.
    k11, k12 = jax.random.split(k9)
    B7 = 4
    g7 = jax.random.normal(k11, (B7, 2 * F), dtype=jnp.float32)
    t7 = jax.random.normal(k12, (B7, 2 * F), dtype=jnp.float32)
    out7 = jax.block_until_ready(
        gamma_loss(g7, t7, delta=delta, smoothness_weight=w))
    ref7 = _gamma_loss_ref(g7, t7, delta=delta, smoothness_weight=w)
    assert jnp.allclose(out7, ref7, rtol=1e-5, atol=1e-5), (out7, ref7)

    print("KERNEL_OK")
</pallas_src>

<mosaic_0001>
module attributes {stable_mosaic.version = 11 : i64} {
  func.func @_gamma_loss_kernel(%arg0: i32, %arg1: i32, %arg2: memref<8x256xf32, #tpu.memory_space<vmem>>, %arg3: memref<8x256xf32, #tpu.memory_space<vmem>>, %arg4: memref<1x2xf32, #tpu.memory_space<smem>>, %arg5: memref<8x128xf32, #tpu.memory_space<vmem>>, %arg6: memref<8x128xf32, #tpu.memory_space<vmem>>) attributes {dimension_semantics = [#tpu.dimension_semantics<parallel>, #tpu.dimension_semantics<arbitrary>], iteration_bounds = array<i64: 1, 1>, scalar_prefetch = 0 : i64, scratch_operands = 2 : i64, tpu.core_type = #tpu.core_type<tc>, window_params = [{transform_indices = @transform_0, window_bounds = array<i64: 8, 256>}, {transform_indices = @transform_1, window_bounds = array<i64: 8, 256>}, {transform_indices = @transform_2, window_bounds = array<i64: 1, 2>}]} {
    %c0_i32 = arith.constant 0 : i32
    %0 = arith.cmpi eq, %arg1, %c0_i32 : i32
    %1 = arith.extui %0 : i1 to i32
    %c0_i32_0 = arith.constant 0 : i32
    %2 = arith.cmpi ne, %1, %c0_i32_0 : i32
    scf.if %2 {
      %cst_22 = arith.constant 0.000000e+00 : f32
      %59 = vector.broadcast %cst_22 : f32 to vector<8x128xf32>
      %c0_23 = arith.constant 0 : index
      %c0_24 = arith.constant 0 : index
      %60 = vector.load %arg5[%c0_23, %c0_24] : memref<8x128xf32, #tpu.memory_space<vmem>>, vector<8x128xf32>
      tpu.vector_store %arg5[%c0_23, %c0_24], %59 {strides = array<i32>} : memref<8x128xf32, #tpu.memory_space<vmem>>, vector<8x128xf32>,
      %cst_25 = arith.constant 0.000000e+00 : f32
      %61 = vector.broadcast %cst_25 : f32 to vector<8x128xf32>
      %c0_26 = arith.constant 0 : index
      %c0_27 = arith.constant 0 : index
      %62 = vector.load %arg6[%c0_26, %c0_27] : memref<8x128xf32, #tpu.memory_space<vmem>>, vector<8x128xf32>
      tpu.vector_store %arg6[%c0_26, %c0_27], %61 {strides = array<i32>} : memref<8x128xf32, #tpu.memory_space<vmem>>, vector<8x128xf32>,
    } else {
    }
    %c0 = arith.constant 0 : index
    %c0_1 = arith.constant 0 : index
    %3 = vector.load %arg2[%c0, %c0_1] : memref<8x256xf32, #tpu.memory_space<vmem>>, vector<8x256xf32>
    %c0_2 = arith.constant 0 : index
    %c0_3 = arith.constant 0 : index
    %4 = vector.load %arg3[%c0_2, %c0_3] : memref<8x256xf32, #tpu.memory_space<vmem>>, vector<8x256xf32>
    %5 = vector.extract_strided_slice %3 {offsets = [0, 0], sizes = [8, 128], strides = [1, 1]} : vector<8x256xf32> to vector<8x128xf32>
    %6 = vector.extract_strided_slice %3 {offsets = [0, 128], sizes = [8, 128], strides = [1, 1]} : vector<8x256xf32> to vector<8x128xf32>
    %7 = vector.extract_strided_slice %4 {offsets = [0, 0], sizes = [8, 128], strides = [1, 1]} : vector<8x256xf32> to vector<8x128xf32>
    %8 = vector.extract_strided_slice %4 {offsets = [0, 128], sizes = [8, 128], strides = [1, 1]} : vector<8x256xf32> to vector<8x128xf32>
    %9 = math.cos %6 : vector<8x128xf32>
    %10 = arith.mulf %5, %9 : vector<8x128xf32>
    %11 = math.sin %6 : vector<8x128xf32>
    %12 = arith.mulf %5, %11 : vector<8x128xf32>
    %13 = math.cos %8 : vector<8x128xf32>
    %14 = arith.mulf %7, %13 : vector<8x128xf32>
    %15 = math.sin %8 : vector<8x128xf32>
    %16 = arith.mulf %7, %15 : vector<8x128xf32>
    %17 = arith.subf %10, %14 : vector<8x128xf32>
    %18 = arith.subf %12, %16 : vector<8x128xf32>
    %19 = math.absf %17 : vector<8x128xf32>
    %20 = math.absf %18 : vector<8x128xf32>
    %21 = arith.addf %19, %20 : vector<8x128xf32>
    %cst = arith.constant 1.000000e+00 : f32
    %22 = vector.broadcast %cst : f32 to vector<8x128xf32>
    %23 = arith.cmpf olt, %21, %22 : vector<8x128xf32>
    %24 = arith.mulf %17, %17 : vector<8x128xf32>
    %25 = arith.mulf %18, %18 : vector<8x128xf32>
    %26 = arith.addf %24, %25 : vector<8x128xf32>
    %cst_4 = arith.constant 5.000000e-01 : f32
    %27 = vector.broadcast %cst_4 : f32 to vector<8x128xf32>
    %28 = arith.mulf %27, %26 : vector<8x128xf32>
    %cst_5 = arith.constant 5.000000e-01 : f32
    %29 = vector.broadcast %cst_5 : f32 to vector<8x128xf32>
    %30 = arith.subf %21, %29 : vector<8x128xf32>
    %cst_6 = arith.constant 1.000000e+00 : f32
    %31 = vector.broadcast %cst_6 : f32 to vector<8x128xf32>
    %32 = arith.mulf %31, %30 : vector<8x128xf32>
    %33 = arith.select %23, %28, %32 : vector<8x128xi1>, vector<8x128xf32>
    %c0_7 = arith.constant 0 : index
    %c0_8 = arith.constant 0 : index
    %34 = vector.load %arg5[%c0_7, %c0_8] : memref<8x128xf32, #tpu.memory_space<vmem>>, vector<8x128xf32>
    %35 = vector.shape_cast %33 : vector<8x128xf32> to vector<1x8x128xf32>
    %cst_9 = arith.constant dense<0.000000e+00> : vector<8x128xf32>
    %36 = vector.multi_reduction <add>, %35, %cst_9 [0] : vector<1x8x128xf32> to vector<8x128xf32>
    %37 = arith.addf %34, %36 : vector<8x128xf32>
    %c0_10 = arith.constant 0 : index
    %c0_11 = arith.constant 0 : index
    %38 = vector.load %arg5[%c0_10, %c0_11] : memref<8x128xf32, #tpu.memory_space<vmem>>, vector<8x128xf32>
    tpu.vector_store %arg5[%c0_10, %c0_11], %37 {strides = array<i32>} : memref<8x128xf32, #tpu.memory_space<vmem>>, vector<8x128xf32>,
    %c127_i32 = arith.constant 127 : i32
    %39 = tpu.dynamic_rotate %5 by %c127_i32 dim 1 : vector<8x128xf32>, i32 -> vector<8x128xf32>
    %c126_i32 = arith.constant 126 : i32
    %40 = tpu.dynamic_rotate %5 by %c126_i32 dim 1 : vector<8x128xf32>, i32 -> vector<8x128xf32>
    %cst_12 = arith.constant 2.000000e+00 : f32
    %41 = vector.broadcast %cst_12 : f32 to vector<8x128xf32>
    %42 = arith.mulf %41, %39 : vector<8x128xf32>
    %43 = arith.subf %40, %42 : vector<8x128xf32>
    %44 = arith.addf %43, %5 : vector<8x128xf32>
    %45 = math.absf %44 : vector<8x128xf32>
    %46 = tpu.iota {dimensions = array<i32: 1>} : vector<8x128xi32>
    %c126_i32_13 = arith.constant 126 : i32
    %47 = vector.broadcast %c126_i32_13 : i32 to vector<8x128xi32>
    %48 = arith.cmpi slt, %46, %47 : vector<8x128xi32>
    %cst_14 = arith.constant 0.000000e+00 : f32
    %49 = vector.broadcast %cst_14 : f32 to vector<8x128xf32>
    %50 = arith.select %48, %45, %49 : vector<8x128xi1>, vector<8x128xf32>
    %c0_15 = arith.constant 0 : index
    %c0_16 = arith.constant 0 : index
    %51 = vector.load %arg6[%c0_15, %c0_16] : memref<8x128xf32, #tpu.memory_space<vmem>>, vector<8x128xf32>
    %52 = vector.shape_cast %50 : vector<8x128xf32> to vector<1x8x128xf32>
    %cst_17 = arith.constant dense<0.000000e+00> : vector<8x128xf32>
    %53 = vector.multi_reduction <add>, %52, %cst_17 [0] : vector<1x8x128xf32> to vector<8x128xf32>
    %54 = arith.addf %51, %53 : vector<8x128xf32>
    %c0_18 = arith.constant 0 : index
    %c0_19 = arith.constant 0 : index
    %55 = vector.load %arg6[%c0_18, %c0_19] : memref<8x128xf32, #tpu.memory_space<vmem>>, vector<8x128xf32>
    tpu.vector_store %arg6[%c0_18, %c0_19], %54 {strides = array<i32>} : memref<8x128xf32, #tpu.memory_space<vmem>>, vector<8x128xf32>,
    %c0_i32_20 = arith.constant 0 : i32
    %56 = arith.cmpi eq, %arg1, %c0_i32_20 : i32
    %57 = arith.extui %56 : i1 to i32
    %c0_i32_21 = arith.constant 0 : i32
    %58 = arith.cmpi ne, %57, %c0_i32_21 : i32
    scf.if %58 {
      %c0_22 = arith.constant 0 : index
      %c0_23 = arith.constant 0 : index
      %59 = vector.load %arg5[%c0_22, %c0_23] : memref<8x128xf32, #tpu.memory_space<vmem>>, vector<8x128xf32>
      %60 = vector.shape_cast %59 : vector<8x128xf32> to vector<1x8x128xf32>
      %cst_24 = arith.constant dense<0.000000e+00> : vector<1xf32>
      %61 = vector.multi_reduction <add>, %60, %cst_24 [1, 2] : vector<1x8x128xf32> to vector<1xf32>
      %62 = vector.shape_cast %61 : vector<1xf32> to vector<1x1x1xf32>
      %63 = vector.extract %62[0, 0, 0] : f32 from vector<1x1x1xf32>
      %c0_25 = arith.constant 0 : index
      %c0_26 = arith.constant 0 : index
      %64 = memref.load %arg4[%c0_25, %c0_26] : memref<1x2xf32, #tpu.memory_space<smem>>
      memref.store %63, %arg4[%c0_25, %c0_26] : memref<1x2xf32, #tpu.memory_space<smem>>
      %c0_27 = arith.constant 0 : index
      %c0_28 = arith.constant 0 : index
      %65 = vector.load %arg6[%c0_27, %c0_28] : memref<8x128xf32, #tpu.memory_space<vmem>>, vector<8x128xf32>
      %66 = vector.shape_cast %65 : vector<8x128xf32> to vector<1x8x128xf32>
      %cst_29 = arith.constant dense<0.000000e+00> : vector<1xf32>
      %67 = vector.multi_reduction <add>, %66, %cst_29 [1, 2] : vector<1x8x128xf32> to vector<1xf32>
      %68 = vector.shape_cast %67 : vector<1xf32> to vector<1x1x1xf32>
      %69 = vector.extract %68[0, 0, 0] : f32 from vector<1x1x1xf32>
      %c0_30 = arith.constant 0 : index
      %c1 = arith.constant 1 : index
      %70 = memref.load %arg4[%c0_30, %c1] : memref<1x2xf32, #tpu.memory_space<smem>>
      memref.store %69, %arg4[%c0_30, %c1] : memref<1x2xf32, #tpu.memory_space<smem>>
    } else {
    }
    return
  }
  func.func @transform_0(%arg0: i32, %arg1: i32) -> (i32, i32) {
    %c1_i32 = arith.constant 1 : i32
    %0 = arith.muli %arg0, %c1_i32 : i32
    %1 = arith.addi %0, %arg1 : i32
    %c0_i32 = arith.constant 0 : i32
    %c0_i32_0 = arith.constant 0 : i32
    return %1, %c0_i32 : i32, i32
  }
  func.func @transform_1(%arg0: i32, %arg1: i32) -> (i32, i32) {
    %c1_i32 = arith.constant 1 : i32
    %0 = arith.muli %arg0, %c1_i32 : i32
    %1 = arith.addi %0, %arg1 : i32
    %c0_i32 = arith.constant 0 : i32
    %c0_i32_0 = arith.constant 0 : i32
    return %1, %c0_i32 : i32, i32
  }
  func.func @transform_2(%arg0: i32, %arg1: i32) -> (i32, i32) {
    %c0_i32 = arith.constant 0 : i32
    %c0_i32_0 = arith.constant 0 : i32
    return %arg0, %c0_i32 : i32, i32
  }
}

</mosaic_0001>

<llo_original>
// kernel: tpu_custom_call.1
$region0: #{tpu_custom_call.1}
  #allocation0 [shape = 'u32[]', space=smem, size = 0x4, offset = 0x4, fixed_abs, tag = 'smem constant byte address 0x4 - core index']
  #allocation1 [shape = 'u32[144,128]{1,0:T(1,128)}', space=vmem, size = 0x12000, scoped, tag = 'internal scratch']
  #allocation2 [shape = 'f32[8,128]{1,0:T(8,128)}', space=vmem, size = 0x1000, scoped, tag = 'scratch operand']
  #allocation3 [shape = 'f32[8,128]{1,0:T(8,128)}', space=vmem, size = 0x1000, scoped, tag = 'scratch operand']
  %s0 = inlined_call_operand.hbm [shape: f32[8,256], index: 0, kind: input, shape index: {}]
  %s1 = inlined_call_operand.hbm [shape: f32[8,256], index: 1, kind: input, shape index: {}]
  %s2 = inlined_call_operand.hbm [shape: f32[1,2], index: 2, kind: output, shape index: {}]
  %s3 = sld [smem:[#allocation0]]
  $region34: #{tpu_custom_call.1} parent=0
    _
  %s5 = ssub.s32 1, %s3
  %s6 = scalar_select 0, %s5, %s3
  $region1: #{tpu_custom_call.1} parent=0
    #allocation4 [shape = 'u8[8192]{0}', space=vmem, size = 0x2000, scoped, tag = 'input window, operand 0, single buffered']
    #allocation5 [shape = 's32[1]{0}', space=sflag, size = 0x4, scoped, tag = 'scoped memory for tpu_custom_call.1']
    #allocation6 [shape = 's32[1]{0}', space=sflag, size = 0x4, scoped, tag = 'scoped memory for tpu_custom_call.1']
    #allocation7 [shape = 'u8[8192]{0}', space=vmem, size = 0x2000, scoped, tag = 'input window, operand 1, single buffered']
    #allocation8 [shape = 's32[1]{0}', space=sflag, size = 0x4, scoped, tag = 'scoped memory for tpu_custom_call.1']
    #allocation9 [shape = 'u8[512]{0}', space=smem, size = 0x200, scoped, tag = 'output window, operand 0, single buffered']
    %7 = vsyncpa [#allocation5], 0
    %8 = vsyncpa [#allocation8], 0
    %9 = vsyncpa [#allocation6], 0
    // Predicated region
    $region2: #{tpu_custom_call.1} parent=1 // pred_check
      _
    $region3: #{tpu_custom_call.1} parent=1 // pred_check_branch
      %11 = sbr.rel (0) target = $region5
    $region4: #{tpu_custom_call.1} parent=1 // pred_region
      %s12 = sadd.s32 0, 0
      %s14 = ssub.s32 256, 256
      %15 = vsyncadd [#allocation5], %s14
      %s16 = smul.addr %s12, 2
      %s17 = smul.addr %s16, 128
      %s18 = scalar_lea.hbm %s0, %s17
      %s20 = sshll.u32 [#allocation4], 4
      %s21 = int_to_ptr.vmem [resolvable:$true] %s20
      %23 = dma.hbm_to_vmem [thread:$0]  %s18, 256, %s21, [#allocation5]
    $region5: #{tpu_custom_call.1} parent=1 // pred_fallthru
      _
    // Predicated region
    $region6: #{tpu_custom_call.1} parent=1 // pred_check
      _
    $region7: #{tpu_custom_call.1} parent=1 // pred_check_branch
      %25 = sbr.rel (0) target = $region9
    $region8: #{tpu_custom_call.1} parent=1 // pred_region
      %s26 = sadd.s32 0, 0
      %s28 = ssub.s32 256, 256
      %29 = vsyncadd [#allocation8], %s28
      %s30 = smul.addr %s26, 2
      %s31 = smul.addr %s30, 128
      %s32 = scalar_lea.hbm %s1, %s31
      %s34 = sshll.u32 [#allocation7], 4
      %s35 = int_to_ptr.vmem [resolvable:$true] %s34
      %37 = dma.hbm_to_vmem [thread:$0]  %s32, 256, %s35, [#allocation8]
    $region9: #{tpu_custom_call.1} parent=1 // pred_fallthru
      _
    // Predicated region
    $region10: #{tpu_custom_call.1} parent=1 // pred_check
      _
    $region11: #{tpu_custom_call.1} parent=1 // pred_check_branch
      %39 = sbr.rel (0) target = $region13
    $region12: #{tpu_custom_call.1} parent=1 // pred_region
      %40 = dma.done [#allocation5], 256
    $region13: #{tpu_custom_call.1} parent=1 // pred_fallthru
      _
    // Predicated region
    $region14: #{tpu_custom_call.1} parent=1 // pred_check
      _
    $region15: #{tpu_custom_call.1} parent=1 // pred_check_branch
      %42 = sbr.rel (0) target = $region17
    $region16: #{tpu_custom_call.1} parent=1 // pred_region
      %43 = dma.done [#allocation8], 256
    $region17: #{tpu_custom_call.1} parent=1 // pred_fallthru
      _
    %s44 = sadd.s32 0, 0
    %s45 = sadd.s32 0, 0
    %p46 = scmp.eq.s32.totalorder 0, 0
    // Predicated region
    $region18: #{tpu_custom_call.1} parent=1 // pred_check
      %p47 = pneg %p46
    $region19: #{tpu_custom_call.1} parent=1 // pred_check_branch
      %49 = sbr.rel (%p47) target = $region21
    $region20: #{tpu_custom_call.1} parent=1 // pred_region
      %50 = vst [vmem:[#allocation2] sm:$0xff] 0.0
      %51 = vst [vmem:[#allocation3] sm:$0xff] 0.0
    $region21: #{tpu_custom_call.1} parent=1 // pred_fallthru
      _
    %v52 = vld [vmem:[#allocation4] sm:$0xff]
    %v53 = vld [vmem:[#allocation4 + $0x8] sm:$0xff]
    %v54 = vld [vmem:[#allocation7] sm:$0xff]
    %v55 = vld [vmem:[#allocation7 + $0x8] sm:$0xff]
    %v56 = vand.u32 2147483647, %v53
    %vm57 = vcmp.le.f32.partialorder %v56, 0.7853982
    %vm58 = vcmp.lt.s32.totalorder %v53, 0
    %v59 = vand.u32 %v53, 2139095040
    %v60 = vshrl.u32 %v59, 23
    %v61 = vsub.s32 %v60, 127
    %v62 = vand.u32 2147483647, %v53
    %v63 = vand.u32 %v62, 8388607
    %v64 = vor.u32 %v63, 8388608
    %v65 = vsub.s32 0, %v64
    %v66 = vadd.s32 %v61, 1
    %vm67 = vcmp.gt.s32.totalorder %v66, 0
    %v68 = vsel %vm67, %v66, 0
    %v69 = vshrl.u32 %v68, 5
    %v70 = vand.u32 %v68, 31
    %v71 = vsub.s32 32, %v70
    %v72 = vshrl.u32 683565275, %v71
    %v73 = vshll.u32 683565275, %v70
    %v74 = vshrl.u32 2475754826, %v71
    %v75 = vor.u32 %v73, %v74
    %v76 = vshll.u32 2475754826, %v70
    %v77 = vshrl.u32 2131351028, %v71
    %v78 = vor.u32 %v76, %v77
    %v79 = vshll.u32 2131351028, %v70
    %v80 = vshrl.u32 2102212464, %v71
    %v81 = vor.u32 %v79, %v80
    %v82 = vshll.u32 2102212464, %v70
    %v83 = vshrl.u32 920167782, %v71
    %v84 = vor.u32 %v82, %v83
    %v85 = vshll.u32 920167782, %v70
    %v86 = vshrl.u32 1326507024, %v71
    %v87 = vor.u32 %v85, %v86
    %vm88 = vcmp.lt.s32.totalorder %v69, 1
    %vm89 = vcmp.lt.s32.totalorder %v69, 2
    %vm90 = vcmp.lt.s32.totalorder %v69, 3
    %vm91 = vcmp.lt.s32.totalorder %v69, 4
    %v92 = vsel %vm88, %v72, %v75
    %v93 = vsel %vm91, %v81, 2102212464
    %v94 = vsel %vm90, %v78, %v93
    %v95 = vsel %vm89, %v92, %v94
    %v96 = vsel %vm88, %v75, %v78
    %v97 = vsel %vm91, %v84, 920167782
    %v98 = vsel %vm90, %v81, %v97
    %v99 = vsel %vm89, %v96, %v98
    %v100 = vsel %vm88, %v78, %v81
    %v101 = vsel %vm91, %v87, 1326507024
    %v102 = vsel %vm90, %v84, %v101
    %v103 = vsel %vm89, %v100, %v102
    %v104 = vshll.u32 %v64, 8
    %v105 = vmul.u32.u64.compose %v104, %v103
    %v106 = vextract.low.u32 %v105
    %v107 = vextract.high.u32 %v105
    %v108 = vmul.u32.u64.compose %v104, %v99
    %v109 = vextract.low.u32 %v108
    %v110 = vextract.high.u32 %v108
    %v111 = vmul.u32 %v104, %v95
    %v112 = vadd.s32 %v107, %v109
    %vm113 = vc.u32 %v107, %v109
    %v114 = vadd.s32 %v110, 1
    %v115 = vsel %vm113, %v114, %v110
    %v116 = vadd.s32 %v111, %v115
    %v117 = vadd.s32 %v116, 536870912
    %v118 = vshrl.u32 %v117, 30
    %v119 = vshll.u32 %v118, 30
    %v120 = vsub.s32 %v116, %v119
    %vm121 = vcmp.lt.s32.totalorder %v120, 0
    %v122 = vsub.s32 0, %v120
    %v123 = vsel %vm121, %v122, %v120
    %v124 = vclz %v123
    %v125 = vsub.s32 %v124, 2
    %vm126 = vcmp.gt.s32.totalorder 0, %v125
    %v127 = vsel %vm126, 0, %v125
    %v128 = vsub.s32 32, %v127
    %v129 = vshll.u32 %v120, %v127
    %v130 = vshrl.u32 %v112, %v128
    %v131 = vor.u32 %v129, %v130
    %v132 = vsub.s32 4294967266, %v127
    %v133 = vadd.s32 %v132, 127
    %v134 = vshll.u32 %v133, 23
    %v135 = vor.u32 4788187, %v134
    %v136 = vand.u32 2147483647, %v135
    %v138 = vcvt.s32.f32 %v131
    %v139 = vmul.f32 %v138, %v136
    %v140 = vxor.u32 %v139, 2147483648
    %v141 = vsel %vm58, %v140, %v139
    %v142 = vsub.s32 4, %v118
    %v143 = vsel %vm58, %v142, %v118
    %v144 = vsel %vm57, %v53, %v141
    %v145 = vsel %vm57, 0, %v143
    %v146 = vcosq.f32.pop %v144
    %v147 = vsinq.f32.pop %v144
    %vm148 = vweird.f32 %v53
    %v149 = vand.u32 %v145, 3
    %vm150 = vcmp.lt.s32.totalorder %v149, 2
    %vm151 = vcmp.eq.s32.totalorder %v149, 0
    %v152 = vxor.u32 %v147, 2147483648
    %v153 = vsel %vm151, %v146, %v152
    %vm154 = vcmp.eq.s32.totalorder %v149, 2
    %v155 = vxor.u32 %v146, 2147483648
    %v156 = vsel %vm154, %v155, %v147
    %v157 = vsel %vm150, %v153, %v156
    %v158 = vsel %vm148, nan, %v157
    %v159 = vmul.f32 %v52, %v158
    %v160 = vand.u32 2147483647, %v53
    %vm161 = vcmp.le.f32.partialorder %v160, 0.7853982
    %vm162 = vcmp.lt.s32.totalorder %v53, 0
    %v163 = vand.u32 %v53, 2139095040
    %v164 = vshrl.u32 %v163, 23
    %v165 = vsub.s32 %v164, 127
    %v166 = vand.u32 2147483647, %v53
    %v167 = vand.u32 %v166, 8388607
    %v168 = vor.u32 %v167, 8388608
    %v169 = vsub.s32 0, %v168
    %v170 = vadd.s32 %v165, 1
    %vm171 = vcmp.gt.s32.totalorder %v170, 0
    %v172 = vsel %vm171, %v170, 0
    %v173 = vshrl.u32 %v172, 5
    %v174 = vand.u32 %v172, 31
    %v175 = vsub.s32 32, %v174
    %v176 = vshrl.u32 683565275, %v175
    %v177 = vshll.u32 683565275, %v174
    %v178 = vshrl.u32 2475754826, %v175
    %v179 = vor.u32 %v177, %v178
    %v180 = vshll.u32 2475754826, %v174
    %v181 = vshrl.u32 2131351028, %v175
    %v182 = vor.u32 %v180, %v181
    %v183 = vshll.u32 2131351028, %v174
    %v184 = vshrl.u32 2102212464, %v175
    %v185 = vor.u32 %v183, %v184
    %v186 = vshll.u32 2102212464, %v174
    %v187 = vshrl.u32 920167782, %v175
    %v188 = vor.u32 %v186, %v187
    %v189 = vshll.u32 920167782, %v174
    %v190 = vshrl.u32 1326507024, %v175
    %v191 = vor.u32 %v189, %v190
    %vm192 = vcmp.lt.s32.totalorder %v173, 1
    %vm193 = vcmp.lt.s32.totalorder %v173, 2
    %vm194 = vcmp.lt.s32.totalorder %v173, 3
    %vm195 = vcmp.lt.s32.totalorder %v173, 4
    %v196 = vsel %vm192, %v176, %v179
    %v197 = vsel %vm195, %v185, 2102212464
    %v198 = vsel %vm194, %v182, %v197
    %v199 = vsel %vm193, %v196, %v198
    %v200 = vsel %vm192, %v179, %v182
    %v201 = vsel %vm195, %v188, 920167782
    %v202 = vsel %vm194, %v185, %v201
    %v203 = vsel %vm193, %v200, %v202
    %v204 = vsel %vm192, %v182, %v185
    %v205 = vsel %vm195, %v191, 1326507024
    %v206 = vsel %vm194, %v188, %v205
    %v207 = vsel %vm193, %v204, %v206
    %v208 = vshll.u32 %v168, 8
    %v209 = vmul.u32.u64.compose %v208, %v207
    %v210 = vextract.low.u32 %v209
    %v211 = vextract.high.u32 %v209
    %v212 = vmul.u32.u64.compose %v208, %v203
    %v213 = vextract.low.u32 %v212
    %v214 = vextract.high.u32 %v212
    %v215 = vmul.u32 %v208, %v199
    %v216 = vadd.s32 %v211, %v213
    %vm217 = vc.u32 %v211, %v213
    %v218 = vadd.s32 %v214, 1
    %v219 = vsel %vm217, %v218, %v214
    %v220 = vadd.s32 %v215, %v219
    %v221 = vadd.s32 %v220, 536870912
    %v222 = vshrl.u32 %v221, 30
    %v223 = vshll.u32 %v222, 30
    %v224 = vsub.s32 %v220, %v223
    %vm225 = vcmp.lt.s32.totalorder %v224, 0
    %v226 = vsub.s32 0, %v224
    %v227 = vsel %vm225, %v226, %v224
    %v228 = vclz %v227
    %v229 = vsub.s32 %v228, 2
    %vm230 = vcmp.gt.s32.totalorder 0, %v229
    %v231 = vsel %vm230, 0, %v229
    %v232 = vsub.s32 32, %v231
    %v233 = vshll.u32 %v224, %v231
    %v234 = vshrl.u32 %v216, %v232
    %v235 = vor.u32 %v233, %v234
    %v236 = vsub.s32 4294967266, %v231
    %v237 = vadd.s32 %v236, 127
    %v238 = vshll.u32 %v237, 23
    %v239 = vor.u32 4788187, %v238
    %v240 = vand.u32 2147483647, %v239
    %v242 = vcvt.s32.f32 %v235
    %v243 = vmul.f32 %v242, %v240
    %v244 = vxor.u32 %v243, 2147483648
    %v245 = vsel %vm162, %v244, %v243
    %v246 = vsub.s32 4, %v222
    %v247 = vsel %vm162, %v246, %v222
    %v248 = vsel %vm161, %v53, %v245
    %v249 = vsel %vm161, 0, %v247
    %v250 = vcosq.f32.pop %v248
    %v251 = vsinq.f32.pop %v248
    %vm252 = vweird.f32 %v53
    %v253 = vadd.s32 %v249, 3
    %v254 = vand.u32 %v253, 3
    %vm255 = vcmp.lt.s32.totalorder %v254, 2
    %vm256 = vcmp.eq.s32.totalorder %v254, 0
    %v257 = vxor.u32 %v251, 2147483648
    %v258 = vsel %vm256, %v250, %v257
    %vm259 = vcmp.eq.s32.totalorder %v254, 2
    %v260 = vxor.u32 %v250, 2147483648
    %v261 = vsel %vm259, %v260, %v251
    %v262 = vsel %vm255, %v258, %v261
    %v263 = vsel %vm252, nan, %v262
    %v264 = vmul.f32 %v52, %v263
    %v265 = vand.u32 2147483647, %v55
    %vm266 = vcmp.le.f32.partialorder %v265, 0.7853982
    %vm267 = vcmp.lt.s32.totalorder %v55, 0
    %v268 = vand.u32 %v55, 2139095040
    %v269 = vshrl.u32 %v268, 23
    %v270 = vsub.s32 %v269, 127
    %v271 = vand.u32 2147483647, %v55
    %v272 = vand.u32 %v271, 8388607
    %v273 = vor.u32 %v272, 8388608
    %v274 = vsub.s32 0, %v273
    %v275 = vadd.s32 %v270, 1
    %vm276 = vcmp.gt.s32.totalorder %v275, 0
    %v277 = vsel %vm276, %v275, 0
    %v278 = vshrl.u32 %v277, 5
    %v279 = vand.u32 %v277, 31
    %v280 = vsub.s32 32, %v279
    %v281 = vshrl.u32 683565275, %v280
    %v282 = vshll.u32 683565275, %v279
    %v283 = vshrl.u32 2475754826, %v280
    %v284 = vor.u32 %v282, %v283
    %v285 = vshll.u32 2475754826, %v279
    %v286 = vshrl.u32 2131351028, %v280
    %v287 = vor.u32 %v285, %v286
    %v288 = vshll.u32 2131351028, %v279
    %v289 = vshrl.u32 2102212464, %v280
    %v290 = vor.u32 %v288, %v289
    %v291 = vshll.u32 2102212464, %v279
    %v292 = vshrl.u32 920167782, %v280
    %v293 = vor.u32 %v291, %v292
    %v294 = vshll.u32 920167782, %v279
    %v295 = vshrl.u32 1326507024, %v280
    %v296 = vor.u32 %v294, %v295
    %vm297 = vcmp.lt.s32.totalorder %v278, 1
    %vm298 = vcmp.lt.s32.totalorder %v278, 2
    %vm299 = vcmp.lt.s32.totalorder %v278, 3
    %vm300 = vcmp.lt.s32.totalorder %v278, 4
    %v301 = vsel %vm297, %v281, %v284
    %v302 = vsel %vm300, %v290, 2102212464
    %v303 = vsel %vm299, %v287, %v302
    %v304 = vsel %vm298, %v301, %v303
    %v305 = vsel %vm297, %v284, %v287
    %v306 = vsel %vm300, %v293, 920167782
    %v307 = vsel %vm299, %v290, %v306
    %v308 = vsel %vm298, %v305, %v307
    %v309 = vsel %vm297, %v287, %v290
    %v310 = vsel %vm300, %v296, 1326507024
    %v311 = vsel %vm299, %v293, %v310
    %v312 = vsel %vm298, %v309, %v311
    %v313 = vshll.u32 %v273, 8
    %v314 = vmul.u32.u64.compose %v313, %v312
    %v315 = vextract.low.u32 %v314
    %v316 = vextract.high.u32 %v314
    %v317 = vmul.u32.u64.compose %v313, %v308
    %v318 = vextract.low.u32 %v317
    %v319 = vextract.high.u32 %v317
    %v320 = vmul.u32 %v313, %v304
    %v321 = vadd.s32 %v316, %v318
    %vm322 = vc.u32 %v316, %v318
    %v323 = vadd.s32 %v319, 1
    %v324 = vsel %vm322, %v323, %v319
    %v325 = vadd.s32 %v320, %v324
    %v326 = vadd.s32 %v325, 536870912
    %v327 = vshrl.u32 %v326, 30
    %v328 = vshll.u32 %v327, 30
    %v329 = vsub.s32 %v325, %v328
    %vm330 = vcmp.lt.s32.totalorder %v329, 0
    %v331 = vsub.s32 0, %v329
    %v332 = vsel %vm330, %v331, %v329
    %v333 = vclz %v332
    %v334 = vsub.s32 %v333, 2
    %vm335 = vcmp.gt.s32.totalorder 0, %v334
    %v336 = vsel %vm335, 0, %v334
    %v337 = vsub.s32 32, %v336
    %v338 = vshll.u32 %v329, %v336
    %v339 = vshrl.u32 %v321, %v337
    %v340 = vor.u32 %v338, %v339
    %v341 = vsub.s32 4294967266, %v336
    %v342 = vadd.s32 %v341, 127
    %v343 = vshll.u32 %v342, 23
    %v344 = vor.u32 4788187, %v343
    %v345 = vand.u32 2147483647, %v344
    %v347 = vcvt.s32.f32 %v340
    %v348 = vmul.f32 %v347, %v345
    %v349 = vxor.u32 %v348, 2147483648
    %v350 = vsel %vm267, %v349, %v348
    %v351 = vsub.s32 4, %v327
    %v352 = vsel %vm267, %v351, %v327
    %v353 = vsel %vm266, %v55, %v350
    %v354 = vsel %vm266, 0, %v352
    %v355 = vcosq.f32.pop %v353
    %v356 = vsinq.f32.pop %v353
    %vm357 = vweird.f32 %v55
    %v358 = vand.u32 %v354, 3
    %vm359 = vcmp.lt.s32.totalorder %v358, 2
    %vm360 = vcmp.eq.s32.totalorder %v358, 0
    %v361 = vxor.u32 %v356, 2147483648
    %v362 = vsel %vm360, %v355, %v361
    %vm363 = vcmp.eq.s32.totalorder %v358, 2
    %v364 = vxor.u32 %v355, 2147483648
    %v365 = vsel %vm363, %v364, %v356
    %v366 = vsel %vm359, %v362, %v365
    %v367 = vsel %vm357, nan, %v366
    %v368 = vmul.f32 %v54, %v367
    %v369 = vand.u32 2147483647, %v55
    %vm370 = vcmp.le.f32.partialorder %v369, 0.7853982
    %vm371 = vcmp.lt.s32.totalorder %v55, 0
    %v372 = vand.u32 %v55, 2139095040
    %v373 = vshrl.u32 %v372, 23
    %v374 = vsub.s32 %v373, 127
    %v375 = vand.u32 2147483647, %v55
    %v376 = vand.u32 %v375, 8388607
    %v377 = vor.u32 %v376, 8388608
    %v378 = vsub.s32 0, %v377
    %v379 = vadd.s32 %v374, 1
    %vm380 = vcmp.gt.s32.totalorder %v379, 0
    %v381 = vsel %vm380, %v379, 0
    %v382 = vshrl.u32 %v381, 5
    %v383 = vand.u32 %v381, 31
    %v384 = vsub.s32 32, %v383
    %v385 = vshrl.u32 683565275, %v384
    %v386 = vshll.u32 683565275, %v383
    %v387 = vshrl.u32 2475754826, %v384
    %v388 = vor.u32 %v386, %v387
    %v389 = vshll.u32 2475754826, %v383
    %v390 = vshrl.u32 2131351028, %v384
    %v391 = vor.u32 %v389, %v390
    %v392 = vshll.u32 2131351028, %v383
    %v393 = vshrl.u32 2102212464, %v384
    %v394 = vor.u32 %v392, %v393
    %v395 = vshll.u32 2102212464, %v383
    %v396 = vshrl.u32 920167782, %v384
    %v397 = vor.u32 %v395, %v396
    %v398 = vshll.u32 920167782, %v383
    %v399 = vshrl.u32 1326507024, %v384
    %v400 = vor.u32 %v398, %v399
    %vm401 = vcmp.lt.s32.totalorder %v382, 1
    %vm402 = vcmp.lt.s32.totalorder %v382, 2
    %vm403 = vcmp.lt.s32.totalorder %v382, 3
    %vm404 = vcmp.lt.s32.totalorder %v382, 4
    %v405 = vsel %vm401, %v385, %v388
    %v406 = vsel %vm404, %v394, 2102212464
    %v407 = vsel %vm403, %v391, %v406
    %v408 = vsel %vm402, %v405, %v407
    %v409 = vsel %vm401, %v388, %v391
    %v410 = vsel %vm404, %v397, 920167782
    %v411 = vsel %vm403, %v394, %v410
    %v412 = vsel %vm402, %v409, %v411
    %v413 = vsel %vm401, %v391, %v394
    %v414 = vsel %vm404, %v400, 1326507024
    %v415 = vsel %vm403, %v397, %v414
    %v416 = vsel %vm402, %v413, %v415
    %v417 = vshll.u32 %v377, 8
    %v418 = vmul.u32.u64.compose %v417, %v416
    %v419 = vextract.low.u32 %v418
    %v420 = vextract.high.u32 %v418
    %v421 = vmul.u32.u64.compose %v417, %v412
    %v422 = vextract.low.u32 %v421
    %v423 = vextract.high.u32 %v421
    %v424 = vmul.u32 %v417, %v408
    %v425 = vadd.s32 %v420, %v422
    %vm426 = vc.u32 %v420, %v422
    %v427 = vadd.s32 %v423, 1
    %v428 = vsel %vm426, %v427, %v423
    %v429 = vadd.s32 %v424, %v428
    %v430 = vadd.s32 %v429, 536870912
    %v431 = vshrl.u32 %v430, 30
    %v432 = vshll.u32 %v431, 30
    %v433 = vsub.s32 %v429, %v432
    %vm434 = vcmp.lt.s32.totalorder %v433, 0
    %v435 = vsub.s32 0, %v433
    %v436 = vsel %vm434, %v435, %v433
    %v437 = vclz %v436
    %v438 = vsub.s32 %v437, 2
    %vm439 = vcmp.gt.s32.totalorder 0, %v438
    %v440 = vsel %vm439, 0, %v438
    %v441 = vsub.s32 32, %v440
    %v442 = vshll.u32 %v433, %v440
    %v443 = vshrl.u32 %v425, %v441
    %v444 = vor.u32 %v442, %v443
    %v445 = vsub.s32 4294967266, %v440
    %v446 = vadd.s32 %v445, 127
    %v447 = vshll.u32 %v446, 23
    %v448 = vor.u32 4788187, %v447
    %v449 = vand.u32 2147483647, %v448
    %v451 = vcvt.s32.f32 %v444
    %v452 = vmul.f32 %v451, %v449
    %v453 = vxor.u32 %v452, 2147483648
    %v454 = vsel %vm371, %v453, %v452
    %v455 = vsub.s32 4, %v431
    %v456 = vsel %vm371, %v455, %v431
    %v457 = vsel %vm370, %v55, %v454
    %v458 = vsel %vm370, 0, %v456
    %v459 = vcosq.f32.pop %v457
    %v460 = vsinq.f32.pop %v457
    %vm461 = vweird.f32 %v55
    %v462 = vadd.s32 %v458, 3
    %v463 = vand.u32 %v462, 3
    %vm464 = vcmp.lt.s32.totalorder %v463, 2
    %vm465 = vcmp.eq.s32.totalorder %v463, 0
    %v466 = vxor.u32 %v460, 2147483648
    %v467 = vsel %vm465, %v459, %v466
    %vm468 = vcmp.eq.s32.totalorder %v463, 2
    %v469 = vxor.u32 %v459, 2147483648
    %v470 = vsel %vm468, %v469, %v460
    %v471 = vsel %vm464, %v467, %v470
    %v472 = vsel %vm461, nan, %v471
    %v473 = vmul.f32 %v54, %v472
    %v474 = vsub.f32 %v159, %v368
    %v475 = vsub.f32 %v264, %v473
    %v476 = vand.u32 2147483647, %v474
    %v477 = vand.u32 2147483647, %v475
    %v478 = vadd.f32 %v476, %v477
    %vm479 = vcmp.lt.f32.partialorder %v478, 1.0
    %v480 = vmul.f32 %v474, %v474
    %v481 = vmul.f32 %v475, %v475
    %v482 = vadd.f32 %v480, %v481
    %v483 = vmul.f32 %v482, 0.5
    %v484 = vsub.f32 %v478, 0.5
    %v485 = vsel %vm479, %v483, %v484
    %v486 = vld [vmem:[#allocation2] sm:$0xff]
    %v487 = vadd.f32 %v485, 0.0
    %v488 = vadd.f32 %v486, %v487
    %489 = vst [vmem:[#allocation2] sm:$0xff] %v488
    %490 = vrot.lane.b32.xlu0 %v52, 127
    %v491 = vpop.permute.xlu0 %490
    %492 = vrot.lane.b32.xlu0 %v52, 126
    %v493 = vpop.permute.xlu0 %492
    %v494 = vmul.f32 %v491, 2.0
    %v495 = vsub.f32 %v493, %v494
    %v496 = vadd.f32 %v495, %v52
    %v497 = vand.u32 2147483647, %v496
    %v498 = vlaneseq
    %v499 = vand.u32 %v498, 127
    %vm500 = vcmp.lt.s32.totalorder %v499, 126
    %v501 = vsel %vm500, %v497, 0.0
    %v502 = vld [vmem:[#allocation3] sm:$0xff]
    %v503 = vadd.f32 %v501, 0.0
    %v504 = vadd.f32 %v502, %v503
    %505 = vst [vmem:[#allocation3] sm:$0xff] %v504
    // Predicated region
    $region22: #{tpu_custom_call.1} parent=1 // pred_check
      %p506 = pneg %p46
    $region23: #{tpu_custom_call.1} parent=1 // pred_check_branch
      %508 = sbr.rel (%p506) target = $region25
    $region24: #{tpu_custom_call.1} parent=1 // pred_region
      %v509 = vld [vmem:[#allocation2] sm:$0xff]
      %510 = vadd.xlane.f32.xlu0 %v509
      %v511 = vpop.xlane.xlu0 %510
      %v512 = vrot.slane %v511, 4
      %v513 = vadd.f32 %v511, %v512
      %v514 = vrot.slane %v513, 2
      %v515 = vadd.f32 %v513, %v514
      %v516 = vrot.slane %v515, 1
      %v517 = vadd.f32 %v515, %v516
      %s518 = vtos %v517
      %s519 = scalar_lea.smem [#allocation9], 0
      %520 = sst [smem:[%s519]] %s518
      %v521 = vld [vmem:[#allocation3] sm:$0xff]
      %522 = vadd.xlane.f32.xlu0 %v521
      %v523 = vpop.xlane.xlu0 %522
      %v524 = vrot.slane %v523, 4
      %v525 = vadd.f32 %v523, %v524
      %v526 = vrot.slane %v525, 2
      %v527 = vadd.f32 %v525, %v526
      %v528 = vrot.slane %v527, 1
      %v529 = vadd.f32 %v527, %v528
      %s530 = vtos %v529
      %s531 = scalar_lea.smem [#allocation9], 1
      %532 = sst [smem:[%s531]] %s530
    $region25: #{tpu_custom_call.1} parent=1 // pred_fallthru
      _
    // Predicated region
    $region26: #{tpu_custom_call.1} parent=1 // pred_check
      _
    $region27: #{tpu_custom_call.1} parent=1 // pred_check_branch
      %534 = sbr.rel (0) target = $region29
    $region28: #{tpu_custom_call.1} parent=1 // pred_region
      %s536 = ssub.s32 16, 16
      %537 = vsyncadd [#allocation6], %s536
      %540 = dma.smem_to_hbm [#allocation9], 16, %s2, [#allocation6]
    $region29: #{tpu_custom_call.1} parent=1 // pred_fallthru
      _
    // Predicated region
    $region30: #{tpu_custom_call.1} parent=1 // pred_check
      _
    $region31: #{tpu_custom_call.1} parent=1 // pred_check_branch
      %542 = sbr.rel (0) target = $region33
    $region32: #{tpu_custom_call.1} parent=1 // pred_region
      %543 = dma.done [#allocation6], 16
    $region33: #{tpu_custom_call.1} parent=1 // pred_fallthru
      _
    %544 = sfence
    %545 = vsyncpa [#allocation5], 1
    %546 = vsyncpa [#allocation8], 1
    %547 = vsyncpa [#allocation6], 1

</llo_original>
